<compile_context>
chip_gen: v7x
topology: tpu7x:2x2x1
jax: 0.10.0
libtpu: 0.0.40
codegen_flags: <defaults>
</compile_context>

<pallas_src>
import jax
import jax.numpy as jnp
from jax import lax
from jax.experimental import pallas as pl
from jax.experimental.pallas import tpu as pltpu

_LANE = 128
_SUBLANE = 8


def _round_up(v, m):
    return (v + m - 1) // m * m


def _hw_info():
    """(vmem_capacity_bytes, multi_tensorcore) with conservative fallbacks."""
    vmem_cap = 64 * 1024 * 1024          # conservative (v7x per-TC) fallback
    try:
        vmem_cap = int(pltpu.get_tpu_info().vmem_capacity_bytes)
    except Exception:
        pass
    multi_tc = False
    try:
        kind = jax.devices()[0].device_kind.lower()
        multi_tc = any(t in kind for t in ("v4", "v5p", "v7", "7x"))
    except Exception:
        pass
    return vmem_cap, multi_tc


def _derive_budgets(vmem_cap):
    """Tile-budget / vmem_limit cap / max contraction tile per VMEM generation."""
    if vmem_cap >= 96 * 1024 * 1024:          # v5e / v6e: 128 MiB VMEM
        return 80 * 1024 * 1024, 104 * 1024 * 1024, 8192
    # v7x: 64 MiB VMEM per TensorCore -> leave headroom for Mosaic scratch.
    return 32 * 1024 * 1024, 48 * 1024 * 1024, 4096


def _auto_block_b(batch, block_d, d_pad, out_dim, budget, in_bytes,
                  w_resident, multi_tc):
    """Batch tile: as large as the VMEM budget allows (multiple of 8)."""
    d_lanes = _round_up(block_d, _LANE)
    n_lanes = _round_up(out_dim, _LANE)
    n_sub = _round_up(out_dim, _SUBLANE)
    if w_resident:
        w_bytes = n_sub * _round_up(d_pad, _LANE) * in_bytes      # single resident copy
    else:
        w_bytes = 2 * n_sub * d_lanes * in_bytes                  # double-buffered tile
    b_bytes = 2 * _SUBLANE * n_lanes * 4                          # bias (tiny, resident)
    # x tile (2 bufs) + out tile (2 bufs, f32-ish) + f32 accumulator, per row.
    per_row = 2 * d_lanes * in_bytes + 2 * n_lanes * 4 + n_lanes * 4
    avail = max(budget - w_bytes - b_bytes, per_row * _SUBLANE)
    bb = (avail // per_row) // _SUBLANE * _SUBLANE
    bb = int(max(_SUBLANE, min(bb, 16384, _round_up(batch, _SUBLANE))))
    if multi_tc and batch > _SUBLANE:
        # 2 TensorCores share the "parallel" batch axis: keep an even grid.
        gb = -(-batch // bb)
        if gb == 1:
            bb = int(_round_up(-(-batch // 2), _SUBLANE))
        elif gb % 2 == 1:
            bb2 = int(max(_SUBLANE, _round_up(-(-batch // (gb + 1)), _SUBLANE)))
            if (-(-batch // bb2)) % 2 == 0:
                bb = bb2
    return bb


def _make_kernel(*, block_d, k_steps, rem, w_resident):
    """Kernel factory; statics baked in via closure."""

    def kernel(x_ref, w_ref, b_ref, o_ref, acc_ref):
        k = pl.program_id(1)
        nk = pl.num_programs(1)

        @pl.when(k == 0)
        def _init():
            acc_ref[...] = jnp.zeros_like(acc_ref)

        x_tile = x_ref[...]
        if rem:
            # Last K tile is ragged: the out-of-range lanes of a partial input
            # block are undefined VMEM, so force them to true zero (W's padded
            # tail is already zero on the host side -> 0 * 0 contribution).
            col = lax.broadcasted_iota(jnp.int32, x_tile.shape, 1)
            keep = jnp.logical_or(k != nk - 1, col < rem)
            x_tile = jnp.where(keep, x_tile, jnp.zeros_like(x_tile))

        if w_resident and k_steps > 1:
            # Full weight is resident in VMEM; take the current K slab in place.
            off = pl.multiple_of(k * block_d, _LANE)
            w_tile = w_ref[:, pl.ds(off, block_d)]
        else:
            w_tile = w_ref[...]

        # (block_b, block_d) . (out_dim, block_d) contracted on the lane axis
        #   -> (block_b, out_dim), accumulated in f32.
        acc_ref[...] += lax.dot_general(
            x_tile, w_tile,
            dimension_numbers=(((1,), (1,)), ((), ())),
            preferred_element_type=jnp.float32,
        )

        @pl.when(k == nk - 1)
        def _finalize():
            o_ref[...] = (acc_ref[...] + b_ref[...]).astype(o_ref.dtype)

    return kernel


def linearized_forward(x, weight, bias, *, block_b=None, block_d=None,
                       vmem_budget_bytes=None, stream_dtype=None):
    """y = x @ weight.T + bias   (PyTorch nn.Linear semantics).

    x:      (batch, num_params)
    weight: (out_dim, num_params)   (PyTorch layout, kept as-is)
    bias:   (out_dim,)
    returns (batch, out_dim) in x's original dtype.
    """
    batch, num_params = x.shape
    out_dim, dw = weight.shape
    assert dw == num_params, (weight.shape, x.shape)
    assert bias.shape == (out_dim,)

    vmem_cap, multi_tc = _hw_info()
    budget, limit_cap, max_block_d = _derive_budgets(vmem_cap)
    if vmem_budget_bytes is not None:
        budget = int(vmem_budget_bytes)

    out_dtype = x.dtype
    if stream_dtype is not None:
        # Opt-in bandwidth saver: stream x/W narrower, still accumulate in f32.
        # Not bit-exact vs. the f32 PyTorch module.
        x = x.astype(stream_dtype)
        weight = weight.astype(stream_dtype)
    in_bytes = jnp.dtype(x.dtype).itemsize

    # ---- contraction (K) tiling: no host-side pad/copy of x -------------------
    if block_d is None:
        block_d = num_params if num_params <= max_block_d else max_block_d
    if block_d >= num_params:
        block_d = num_params
    else:
        assert block_d % _LANE == 0, (
            "block_d must be a multiple of 128 when tiling the contraction")
    k_steps = pl.cdiv(num_params, block_d)
    d_pad = k_steps * block_d
    rem = num_params % block_d if d_pad != num_params else 0
    if d_pad != num_params:
        # Only the small weight is zero-padded on host (out_dim rows -> cheap);
        # the large x stays as-is and is masked in-kernel instead.
        weight = jnp.pad(weight, ((0, 0), (0, d_pad - num_params)))

    # ---- weight residency ------------------------------------------------------
    w_vmem_bytes = _round_up(out_dim, _SUBLANE) * _round_up(d_pad, _LANE) * in_bytes
    w_resident = w_vmem_bytes <= budget // 4

    # ---- batch tiling ------------------------------------------------------------
    if block_b is None:
        block_b = _auto_block_b(batch, block_d, d_pad, out_dim, budget, in_bytes,
                                w_resident, multi_tc)
    block_b = int(max(_SUBLANE, _round_up(block_b, _SUBLANE)))
    block_b = min(block_b, int(_round_up(batch, _SUBLANE)))
    grid_b = pl.cdiv(batch, block_b)

    bias2d = bias.reshape(1, out_dim).astype(jnp.float32)

    vmem_limit = int(min(limit_cap,
                         max(32 * 1024 * 1024, budget + budget // 4)))

    kernel = _make_kernel(block_d=block_d, k_steps=k_steps, rem=rem,
                          w_resident=w_resident)

    if w_resident:
        # Constant index_map -> W is DMA'd into VMEM once and stays resident.
        w_spec = pl.BlockSpec((out_dim, d_pad), lambda i, k: (0, 0))
    else:
        # Streamed, double-buffered K slabs of W.
        w_spec = pl.BlockSpec((out_dim, block_d), lambda i, k: (0, k))

    return pl.pallas_call(
        kernel,
        out_shape=jax.ShapeDtypeStruct((batch, out_dim), out_dtype),
        grid_spec=pltpu.PrefetchScalarGridSpec(
            num_scalar_prefetch=0,
            grid=(grid_b, k_steps),
            in_specs=[
                pl.BlockSpec((block_b, block_d), lambda i, k: (i, k)),   # x tile
                w_spec,                                                  # weight
                pl.BlockSpec((1, out_dim), lambda i, k: (0, 0)),         # bias (resident)
            ],
            out_specs=pl.BlockSpec((block_b, out_dim), lambda i, k: (i, 0)),
            scratch_shapes=[pltpu.VMEM((block_b, out_dim), jnp.float32)],
        ),
        compiler_params=pltpu.CompilerParams(
            dimension_semantics=("parallel", "arbitrary"),
            vmem_limit_bytes=vmem_limit,
        ),
    )(x, weight, bias2d)


def init_linearized_params(key, num_params, out_dim):
    """Matches LinearizedModel: weight zeroed by reset_parameters(); bias keeps
    nn.Linear's default U(-1/sqrt(in), 1/sqrt(in)) init."""
    bound = 1.0 / (num_params ** 0.5)
    weight = jnp.zeros((out_dim, num_params), dtype=jnp.float32)
    bias = jax.random.uniform(key, (out_dim,), dtype=jnp.float32,
                              minval=-bound, maxval=bound)
    return weight, bias


if __name__ == "__main__":
    key = jax.random.PRNGKey(0)
    kx, kb, kw, kx2 = jax.random.split(key, 4)

    # Tiny "base model": an MLP 8 -> 16 -> 4 implies
    #   num_params = 8*16 + 16 + 16*4 + 4 = 212,  out_dim = 4.
    num_params = 8 * 16 + 16 + 16 * 4 + 4
    out_dim = 4
    batch = 8

    x = jax.random.normal(kx, (batch, num_params), dtype=jnp.float32)

    # 1) Module's own init (zero weight + default bias), auto tiling.
    weight, bias = init_linearized_params(kb, num_params, out_dim)
    y = jax.block_until_ready(linearized_forward(x, weight, bias))
    assert y.shape == (batch, out_dim)
    assert jnp.allclose(y, x @ weight.T + bias, atol=1e-5), "zero-weight mismatch"

    # 2) Non-trivial weight, auto tiling (single K step, resident W).
    w_rand = 0.05 * jax.random.normal(kw, (out_dim, num_params), dtype=jnp.float32)
    y2 = jax.block_until_ready(linearized_forward(x, w_rand, bias))
    assert jnp.allclose(y2, x @ w_rand.T + bias, atol=1e-4, rtol=1e-4), \
        "dense forward mismatch"

    # 3) Forced multi-step contraction with a ragged K tail (212 % 128 != 0):
    #    exercises the in-kernel x mask + host-padded W, resident-W slicing path.
    y3 = jax.block_until_ready(
        linearized_forward(x, w_rand, bias, block_b=8, block_d=128))
    assert jnp.allclose(y3, x @ w_rand.T + bias, atol=1e-4, rtol=1e-4), \
        "tiled (resident W) forward mismatch"

    # 4) Force the streamed (non-resident, double-buffered) W variant via a tiny
    #    VMEM budget, plus a ragged batch (13 % 8 != 0) to lock in output masking.
    x2 = jax.random.normal(kx2, (13, num_params), dtype=jnp.float32)
    y4 = jax.block_until_ready(
        linearized_forward(x2, w_rand, bias, block_d=128,
                           vmem_budget_bytes=16 * 1024))
    assert jnp.allclose(y4, x2 @ w_rand.T + bias, atol=1e-4, rtol=1e-4), \
        "tiled (streamed W) forward mismatch"

    print("KERNEL_OK")
</pallas_src>

<mosaic_0001>
module attributes {stable_mosaic.version = 11 : i64} {
  func.func @kernel(%arg0: i32, %arg1: i32, %arg2: memref<8x212xf32, #tpu.memory_space<vmem>>, %arg3: memref<4x212xf32, #tpu.memory_space<vmem>>, %arg4: memref<1x4xf32, #tpu.memory_space<vmem>>, %arg5: memref<8x4xf32, #tpu.memory_space<vmem>>, %arg6: memref<8x4xf32, #tpu.memory_space<vmem>>) attributes {dimension_semantics = [#tpu.dimension_semantics<parallel>, #tpu.dimension_semantics<arbitrary>], iteration_bounds = array<i64: 1, 1>, scalar_prefetch = 0 : i64, scratch_operands = 1 : i64, tpu.core_type = #tpu.core_type<tc>, window_params = [{transform_indices = @transform_0, window_bounds = array<i64: 8, 212>}, {pipeline_mode = #tpu.pipeline_mode<synchronous>, transform_indices = @transform_1, window_bounds = array<i64: 4, 212>}, {pipeline_mode = #tpu.pipeline_mode<synchronous>, transform_indices = @transform_2, window_bounds = array<i64: 1, 4>}, {transform_indices = @transform_3, window_bounds = array<i64: 8, 4>}]} {
    %c0_i32 = arith.constant 0 : i32
    %0 = arith.cmpi eq, %arg1, %c0_i32 : i32
    %1 = arith.extui %0 : i1 to i32
    %c0_i32_0 = arith.constant 0 : i32
    %2 = arith.cmpi ne, %1, %c0_i32_0 : i32
    scf.if %2 {
      %cst_10 = arith.constant 0.000000e+00 : f32
      %12 = vector.broadcast %cst_10 : f32 to vector<8x4xf32>
      %c0_11 = arith.constant 0 : index
      %c0_12 = arith.constant 0 : index
      %13 = vector.load %arg6[%c0_11, %c0_12] : memref<8x4xf32, #tpu.memory_space<vmem>>, vector<8x4xf32>
      tpu.vector_store %arg6[%c0_11, %c0_12], %12 {strides = array<i32>} : memref<8x4xf32, #tpu.memory_space<vmem>>, vector<8x4xf32>,
    } else {
    }
    %c0 = arith.constant 0 : index
    %c0_1 = arith.constant 0 : index
    %3 = vector.load %arg2[%c0, %c0_1] : memref<8x212xf32, #tpu.memory_space<vmem>>, vector<8x212xf32>
    %c0_2 = arith.constant 0 : index
    %c0_3 = arith.constant 0 : index
    %4 = vector.load %arg3[%c0_2, %c0_3] : memref<4x212xf32, #tpu.memory_space<vmem>>, vector<4x212xf32>
    %c0_4 = arith.constant 0 : index
    %c0_5 = arith.constant 0 : index
    %5 = vector.load %arg6[%c0_4, %c0_5] : memref<8x4xf32, #tpu.memory_space<vmem>>, vector<8x4xf32>
    %cst = arith.constant dense<0.000000e+00> : vector<8x4xf32>
    %6 = tpu.matmul %3, %4, %cst {dimension_numbers = #tpu.dot_dimension_numbers<[1], [1], [0], [0], [0, 0, 1, 0], [], []>} : vector<8x212xf32>, vector<4x212xf32>, vector<8x4xf32> -> vector<8x4xf32>
    %7 = arith.addf %5, %6 : vector<8x4xf32>
    %c0_6 = arith.constant 0 : index
    %c0_7 = arith.constant 0 : index
    %8 = vector.load %arg6[%c0_6, %c0_7] : memref<8x4xf32, #tpu.memory_space<vmem>>, vector<8x4xf32>
    tpu.vector_store %arg6[%c0_6, %c0_7], %7 {strides = array<i32>} : memref<8x4xf32, #tpu.memory_space<vmem>>, vector<8x4xf32>,
    %c0_i32_8 = arith.constant 0 : i32
    %9 = arith.cmpi eq, %arg1, %c0_i32_8 : i32
    %10 = arith.extui %9 : i1 to i32
    %c0_i32_9 = arith.constant 0 : i32
    %11 = arith.cmpi ne, %10, %c0_i32_9 : i32
    scf.if %11 {
      %c0_10 = arith.constant 0 : index
      %c0_11 = arith.constant 0 : index
      %12 = vector.load %arg6[%c0_10, %c0_11] : memref<8x4xf32, #tpu.memory_space<vmem>>, vector<8x4xf32>
      %c0_12 = arith.constant 0 : index
      %c0_13 = arith.constant 0 : index
      %13 = vector.load %arg4[%c0_12, %c0_13] : memref<1x4xf32, #tpu.memory_space<vmem>>, vector<1x4xf32>
      %14 = vector.broadcast %13 : vector<1x4xf32> to vector<8x4xf32>
      %15 = arith.addf %12, %14 : vector<8x4xf32>
      %c0_14 = arith.constant 0 : index
      %c0_15 = arith.constant 0 : index
      %16 = vector.load %arg5[%c0_14, %c0_15] : memref<8x4xf32, #tpu.memory_space<vmem>>, vector<8x4xf32>
      tpu.vector_store %arg5[%c0_14, %c0_15], %15 {strides = array<i32>} : memref<8x4xf32, #tpu.memory_space<vmem>>, vector<8x4xf32>,
    } else {
    }
    return
  }
  func.func @transform_0(%arg0: i32, %arg1: i32) -> (i32, i32) {
    %c0_i32 = arith.constant 0 : i32
    return %arg0, %arg1 : i32, i32
  }
  func.func @transform_1(%arg0: i32, %arg1: i32) -> (i32, i32) {
    %c0_i32 = arith.constant 0 : i32
    %c0_i32_0 = arith.constant 0 : i32
    %c0_i32_1 = arith.constant 0 : i32
    return %c0_i32, %c0_i32_0 : i32, i32
  }
  func.func @transform_2(%arg0: i32, %arg1: i32) -> (i32, i32) {
    %c0_i32 = arith.constant 0 : i32
    %c0_i32_0 = arith.constant 0 : i32
    %c0_i32_1 = arith.constant 0 : i32
    return %c0_i32, %c0_i32_0 : i32, i32
  }
  func.func @transform_3(%arg0: i32, %arg1: i32) -> (i32, i32) {
    %c0_i32 = arith.constant 0 : i32
    %c0_i32_0 = arith.constant 0 : i32
    return %arg0, %c0_i32 : i32, i32
  }
}

</mosaic_0001>

<llo_original>
// kernel: tpu_custom_call.1
$region0: #{tpu_custom_call.1}
  #allocation0 [shape = 'u32[]', space=smem, size = 0x4, offset = 0x4, fixed_abs, tag = 'smem constant byte address 0x4 - core index']
  #allocation1 [shape = 'u32[144,128]{1,0:T(1,128)}', space=vmem, size = 0x12000, scoped, tag = 'internal scratch']
  #allocation2 [shape = 'f32[8,4]{1,0:T(8,128)}', space=vmem, size = 0x1000, scoped, tag = 'scratch operand']
  %s0 = inlined_call_operand.hbm [shape: f32[8,212], index: 0, kind: input, shape index: {}]
  %s1 = inlined_call_operand.hbm [shape: f32[4,212], index: 1, kind: input, shape index: {}]
  %s2 = inlined_call_operand.vmem [shape: f32[1,4], index: 2, kind: input, shape index: {}]
  %s3 = inlined_call_operand.vmem [shape: f32[8,4], index: 3, kind: output, shape index: {}]
  %s4 = sld [smem:[#allocation0]]
  $region38: #{tpu_custom_call.1} parent=0
    _
  %s6 = ssub.s32 1, %s4
  %s7 = scalar_select 0, %s6, %s4
  $region1: #{tpu_custom_call.1} parent=0
    #allocation3 [shape = 'u8[8192]{0}', space=vmem, size = 0x2000, scoped, tag = 'input window, operand 0, single buffered']
    #allocation4 [shape = 's32[1]{0}', space=sflag, size = 0x4, scoped, tag = 'scoped memory for tpu_custom_call.1']
    #allocation5 [shape = 'u8[4096]{0}', space=vmem, size = 0x1000, scoped, tag = 'input window, operand 1, single buffered']
    #allocation6 [shape = 's32[1]{0}', space=sflag, size = 0x4, scoped, tag = 'scoped memory for tpu_custom_call.1']
    %8 = vsyncpa [#allocation4], 0
    %9 = vsyncpa [#allocation6], 0
    // Predicated region
    $region2: #{tpu_custom_call.1} parent=1 // pred_check
      _
    $region3: #{tpu_custom_call.1} parent=1 // pred_check_branch
      %11 = sbr.rel (0) target = $region5
    $region4: #{tpu_custom_call.1} parent=1 // pred_region
      %s13 = ssub.s32 256, 256
      %14 = vsyncadd [#allocation4], %s13
      %s16 = sshll.u32 [#allocation3], 4
      %s17 = int_to_ptr.vmem [resolvable:$true] %s16
      %19 = dma.hbm_to_vmem [thread:$0]  %s0, 256, %s17, [#allocation4]
    $region5: #{tpu_custom_call.1} parent=1 // pred_fallthru
      _
    // Predicated region
    $region6: #{tpu_custom_call.1} parent=1 // pred_check
      _
    $region7: #{tpu_custom_call.1} parent=1 // pred_check_branch
      %21 = sbr.rel (0) target = $region9
    $region8: #{tpu_custom_call.1} parent=1 // pred_region
      %s23 = ssub.s32 128, 128
      %24 = vsyncadd [#allocation6], %s23
      %s26 = sshll.u32 [#allocation5], 4
      %s27 = int_to_ptr.vmem [resolvable:$true] %s26
      %29 = dma.hbm_to_vmem [thread:$0]  %s1, 128, %s27, [#allocation6]
    $region9: #{tpu_custom_call.1} parent=1 // pred_fallthru
      _
    // Predicated region
    $region10: #{tpu_custom_call.1} parent=1 // pred_check
      _
    $region11: #{tpu_custom_call.1} parent=1 // pred_check_branch
      %31 = sbr.rel (0) target = $region13
    $region12: #{tpu_custom_call.1} parent=1 // pred_region
      _
    $region13: #{tpu_custom_call.1} parent=1 // pred_fallthru
      _
    // Predicated region
    $region14: #{tpu_custom_call.1} parent=1 // pred_check
      _
    $region15: #{tpu_custom_call.1} parent=1 // pred_check_branch
      %33 = sbr.rel (0) target = $region17
    $region16: #{tpu_custom_call.1} parent=1 // pred_region
      %34 = dma.done [#allocation4], 256
    $region17: #{tpu_custom_call.1} parent=1 // pred_fallthru
      _
    // Predicated region
    $region18: #{tpu_custom_call.1} parent=1 // pred_check
      _
    $region19: #{tpu_custom_call.1} parent=1 // pred_check_branch
      %36 = sbr.rel (0) target = $region21
    $region20: #{tpu_custom_call.1} parent=1 // pred_region
      %37 = dma.done [#allocation6], 128
    $region21: #{tpu_custom_call.1} parent=1 // pred_fallthru
      _
    %p38 = scmp.eq.s32.totalorder 0, 0
    // Predicated region
    $region22: #{tpu_custom_call.1} parent=1 // pred_check
      %p39 = pneg %p38
    $region23: #{tpu_custom_call.1} parent=1 // pred_check_branch
      %41 = sbr.rel (%p39) target = $region25
    $region24: #{tpu_custom_call.1} parent=1 // pred_region
      %vm42 = vcmask 31744
      %43 = vst.msk [vmem:[#allocation2] sm:$0xff] %vm42, 0.0
    $region25: #{tpu_custom_call.1} parent=1 // pred_fallthru
      _
    %v44 = vld [vmem:[#allocation3] sm:$0xff]
    %v45 = vld [vmem:[#allocation3 + $0x8] sm:$0xff]
    %v46 = vld [vmem:[#allocation5] sm:$0xff]
    %v47 = vld [vmem:[#allocation2] sm:$0xff]
    %v49 = vcombine.high %v46, %v46
    %vm50 = vcmask 687104
    %v52 = vsel %vm50, %v45, 0
    %v54 = vsel %vm50, %v49, 0
    %56 = vmatprep.subr.mxu0 %v54
    %57 = vmatpush1.xpose.msra.mxu0 %v46
    %58 = vmatprep.subr.mxu0 0.0
    %59 = vmatpush1.xpose.msra.mxu0 0.0
    %60 = vmatprep.subr.mxu0 0.0
    %61 = vmatpush1.xpose.msra.mxu0 0.0
    %62 = vmatprep.subr.mxu0 0.0
    %63 = vmatpush1.xpose.msra.mxu0 0.0
    %64 = vmatprep.subr.mxu0 0.0
    %65 = vmatpush1.xpose.msra.mxu0 0.0
    %66 = vmatprep.subr.mxu0 0.0
    %67 = vmatpush1.xpose.msra.mxu0 0.0
    %68 = vmatprep.subr.mxu0 0.0
    %69 = vmatpush1.xpose.msra.mxu0 0.0
    %70 = vmatprep.subr.mxu0 0.0
    %71 = vmatpush1.xpose.msra.mxu0 0.0
    %72 = vmatprep.subr.mxu0 0.0
    %73 = vmatpush1.xpose.msra.mxu0 0.0
    %74 = vmatprep.subr.mxu0 0.0
    %75 = vmatpush1.xpose.msra.mxu0 0.0
    %76 = vmatprep.subr.mxu0 0.0
    %77 = vmatpush1.xpose.msra.mxu0 0.0
    %78 = vmatprep.subr.mxu0 0.0
    %79 = vmatpush1.xpose.msra.mxu0 0.0
    %80 = vmatprep.subr.mxu0 0.0
    %81 = vmatpush1.xpose.msra.mxu0 0.0
    %82 = vmatprep.subr.mxu0 0.0
    %83 = vmatpush1.xpose.msra.mxu0 0.0
    %84 = vmatprep.subr.mxu0 0.0
    %85 = vmatpush1.xpose.msra.mxu0 0.0
    %86 = vmatprep.subr.mxu0 0.0
    %87 = vmatpush1.xpose.msra.mxu0 0.0
    %88 = vmatprep.subr.mxu0 0.0
    %89 = vmatpush1.xpose.msra.mxu0 0.0
    %90 = vmatprep.subr.mxu0 0.0
    %91 = vmatpush1.xpose.msra.mxu0 0.0
    %92 = vmatprep.subr.mxu0 0.0
    %93 = vmatpush1.xpose.msra.mxu0 0.0
    %94 = vmatprep.subr.mxu0 0.0
    %95 = vmatpush1.xpose.msra.mxu0 0.0
    %96 = vmatprep.subr.mxu0 0.0
    %97 = vmatpush1.xpose.msra.mxu0 0.0
    %98 = vmatprep.subr.mxu0 0.0
    %99 = vmatpush1.xpose.msra.mxu0 0.0
    %100 = vmatprep.subr.mxu0 0.0
    %101 = vmatpush1.xpose.msra.mxu0 0.0
    %102 = vmatprep.subr.mxu0 0.0
    %103 = vmatpush1.xpose.msra.mxu0 0.0
    %104 = vmatprep.subr.mxu0 0.0
    %105 = vmatpush1.xpose.msra.mxu0 0.0
    %106 = vmatprep.subr.mxu0 0.0
    %107 = vmatpush1.xpose.msra.mxu0 0.0
    %108 = vmatprep.subr.mxu0 0.0
    %109 = vmatpush1.xpose.msra.mxu0 0.0
    %110 = vmatprep.subr.mxu0 0.0
    %111 = vmatpush1.xpose.msra.mxu0 0.0
    %112 = vmatprep.subr.mxu0 0.0
    %113 = vmatpush1.xpose.msra.mxu0 0.0
    %114 = vmatprep.subr.mxu0 0.0
    %115 = vmatpush1.xpose.msra.mxu0 0.0
    %116 = vmatprep.subr.mxu0 0.0
    %117 = vmatpush1.xpose.msra.mxu0 0.0
    %118 = vmatprep.subr.mxu0 0.0
    %119 = vmatpush1.xpose.msra.mxu0 0.0
    %120 = vmatprep.mubr.f32.mxu0 %v52
    %121 = vmatmul.mubr.f32.gmra.mrb[0].mxu0 %v44
    %v122 = vpop.f32.mrb[0].mxu0
    %v123 = vadd.f32 0.0, %v122
    %v124 = vpop.f32.mrb[0].mxu0
    %125 = vdwg.mxu0
    %v126 = vadd.f32 %v47, %v123
    %vm127 = vcmask 31744
    %128 = vst.msk [vmem:[#allocation2] sm:$0xff] %vm127, %v126
    // Predicated region
    $region26: #{tpu_custom_call.1} parent=1 // pred_check
      %p129 = pneg %p38
    $region27: #{tpu_custom_call.1} parent=1 // pred_check_branch
      %131 = sbr.rel (%p129) target = $region29
    $region28: #{tpu_custom_call.1} parent=1 // pred_region
      %v132 = vld [vmem:[#allocation2] sm:$0xff]
      %v133 = vld [vmem:[%s2] sm:$0x1]
      %v135 = vlaneseq
      %v136 = vshrl.u32 %v135, 7
      %v137 = vsub.s32 0, %v136
      %v138 = vrot.slane %v133, %v137
      %v140 = vadd.f32 %v132, %v138
      %141 = vst.msk [vmem:[%s3] sm:$0xff] %vm127, %v140
    $region29: #{tpu_custom_call.1} parent=1 // pred_fallthru
      _
    // Predicated region
    $region30: #{tpu_custom_call.1} parent=1 // pred_check
      _
    $region31: #{tpu_custom_call.1} parent=1 // pred_check_branch
      %143 = sbr.rel (0) target = $region33
    $region32: #{tpu_custom_call.1} parent=1 // pred_region
      _
    $region33: #{tpu_custom_call.1} parent=1 // pred_fallthru
      _
    // Predicated region
    $region34: #{tpu_custom_call.1} parent=1 // pred_check
      _
    $region35: #{tpu_custom_call.1} parent=1 // pred_check_branch
      %145 = sbr.rel (0) target = $region37
    $region36: #{tpu_custom_call.1} parent=1 // pred_region
      _
    $region37: #{tpu_custom_call.1} parent=1 // pred_fallthru
      _
    %146 = vsyncpa [#allocation4], 1
    %147 = vsyncpa [#allocation6], 1

</llo_original>
